<compile_context>
chip_gen: v7x
topology: tpu7x:2x2x1
jax: 0.10.0
libtpu: 0.0.40
codegen_flags: <defaults>
</compile_context>

<pallas_src>
import functools

import numpy as np
import jax
import jax.numpy as jnp
from jax.experimental import pallas as pl
from jax.experimental.pallas import tpu as pltpu


def _rot90_perm_matrix(k: int, n: int) -> np.ndarray:
    """0/1 matrix P such that (flat_plane @ P) == rot90(plane, k) flattened."""
    hw = n * n
    a = np.arange(hw)
    i, j = divmod(a, n)               # output coordinates for flat index a
    if k == 1:                        # out[i, j] = in[j, n-1-i]
        src = j * n + (n - 1 - i)
    elif k == 2:                      # out[i, j] = in[n-1-i, n-1-j]
        src = hw - 1 - a
    elif k == 3:                      # out[i, j] = in[n-1-j, i]
        src = (n - 1 - j) * n + i
    else:
        raise ValueError(k)
    p = np.zeros((hw, hw), dtype=np.float32)
    p[src, a] = 1.0
    return p


def _plane_permute_kernel(x_ref, p_ref, o_ref):
    # x_ref: (rows, H*W) batch of flattened planes; p_ref: (H*W, H*W) 0/1
    # permutation (VMEM-resident, constant index_map). One lane-dense MXU op
    # per block; exact for float inputs (each output = 1.0 * one input).
    o_ref[...] = jnp.dot(
        x_ref[...], p_ref[...], preferred_element_type=jnp.float32
    ).astype(o_ref.dtype)


def _per_buffer_target_bytes() -> int:
    """Per-buffer DMA block target, gated per TPU generation (perf review)."""
    try:
        kind = jax.devices()[0].device_kind.lower()
    except Exception:  # defensive: fall back to a portable default
        kind = ""
    if "v5 lite" in kind or "v5e" in kind or "v5lite" in kind:
        return 2 * 1024 * 1024   # v5e: 16 MiB scoped-VMEM default, ~0.8 TB/s HBM
    if "v6" in kind:
        return 4 * 1024 * 1024   # v6e: 32 MiB scoped default, ~1.4 TB/s HBM
    if "7" in kind:
        return 8 * 1024 * 1024   # v7x: ~3.2 TB/s per-TC HBM -> bigger blocks
    return 4 * 1024 * 1024       # unknown generation: middle ground


def _sublane_multiple(dtype) -> int:
    """Row rounding for the dtype's sublane packing: f32->8, bf16->16, int8->32."""
    return max(8, 32 // jnp.dtype(dtype).itemsize)


def _pick_block_rows(num_rows: int, hw: int, itemsize: int, sub: int) -> int:
    """Rows per grid step.

    Targets the per-chip block size, keeps rows a multiple of the dtype's
    sublane packing, and (when the array spans more than one minimal block)
    guarantees at least 2 grid steps — preferably an even count — so the
    "parallel" grid axis can be split across v7x's two TensorCores.
    """
    if num_rows <= sub:
        return num_rows            # single full-extent block (grid = 1)
    target = _per_buffer_target_bytes()
    rows = max(sub, (target // (hw * itemsize)) // sub * sub)
    # Ensure at least 2 grid steps: cap at ceil(num_rows / 2), sublane-rounded.
    half = -(-num_rows // 2)
    half = -(-half // sub) * sub
    rows = min(rows, half)
    # Prefer an even number of steps for the 2-TC split (best effort).
    steps = -(-num_rows // rows)
    if steps > 1 and steps % 2 == 1:
        steps += 1
        rows = max(sub, -(-(-(-num_rows // steps)) // sub) * sub)
    return rows


def _rotate_planes(xf, perm):
    """Apply the per-plane permutation `perm` to xf of shape (num_planes, H*W)."""
    rows, hw = xf.shape
    itemsize = xf.dtype.itemsize
    sub = _sublane_multiple(xf.dtype)
    br = _pick_block_rows(rows, hw, itemsize, sub)

    blk_bytes = br * hw * itemsize
    perm_bytes = hw * hw * perm.dtype.itemsize
    # Double-buffered input + output blocks + (double-buffered) perm + headroom.
    vmem_limit = int(
        min(48 * 1024 * 1024,
            max(16 * 1024 * 1024, 4 * blk_bytes + 2 * perm_bytes + (2 << 20))))

    cost = pl.CostEstimate(
        flops=2 * rows * hw * hw,
        transcendentals=0,
        bytes_accessed=2 * rows * hw * itemsize + perm_bytes,
    )

    return pl.pallas_call(
        _plane_permute_kernel,
        out_shape=jax.ShapeDtypeStruct((rows, hw), xf.dtype),
        grid_spec=pltpu.PrefetchScalarGridSpec(
            num_scalar_prefetch=0,
            grid=(pl.cdiv(rows, br),),
            in_specs=[
                pl.BlockSpec((br, hw), lambda r: (r, 0)),
                # Same block every step -> stays VMEM-resident (no re-DMA).
                pl.BlockSpec((hw, hw), lambda r: (0, 0)),
            ],
            out_specs=pl.BlockSpec((br, hw), lambda r: (r, 0)),
        ),
        compiler_params=pltpu.CompilerParams(
            dimension_semantics=("parallel",),
            vmem_limit_bytes=vmem_limit,
        ),
        # Each block fully loads its input tile before writing the same tile
        # back -> in-place is safe; saves the output HBM allocation.
        input_output_aliases={0: 0},
        cost_estimate=cost,
    )(xf, perm)


def _reverse_planes(xf):
    """k == 2: rot180 == reversal of the flattened H*W axis.

    Done as a plain-XLA lane reverse (per review): no MXU work, bit- and
    NaN-exact, and purely HBM-bandwidth-bound on every generation.
    # TODO(synk): move this branch into Pallas with an XLU lane-reverse once
    # lax.rev lowering on the lane axis is verified for this Mosaic version.
    """
    return xf[:, ::-1]


@jax.jit
def rot90_pallas(x, k):
    """rot90(x, k, dims=(2, 3)) for NCHW x and (traced) k in {0, 1, 2, 3}."""
    N, C, H, W = x.shape
    assert H == W, "RandomRot90 Pallas kernel requires square spatial dims (H == W)."
    assert jnp.issubdtype(x.dtype, jnp.floating), (
        "float inputs only (torch.rot90 also supports int/bool; the MXU "
        "permutation path targets float data)")
    hw = H * W
    # Permutation matrices are (H*W, H*W); keep them comfortably VMEM-sized.
    # Above hw ~512 (f32) the permutation-matmul branches drift from
    # HBM-roofline toward MXU-bound; see TODO in the header.
    assert hw <= 1024, "plane too large for the flattened-permutation kernel"

    xf = x.reshape(N * C, hw)          # free reshape of contiguous NCHW
    perm1 = jnp.asarray(_rot90_perm_matrix(1, H), dtype=x.dtype)
    perm3 = jnp.asarray(_rot90_perm_matrix(3, H), dtype=x.dtype)
    branches = [
        lambda a: a,                                        # k == 0: identity
        functools.partial(_rotate_planes, perm=perm1),      # k == 1
        _reverse_planes,                                    # k == 2: lane reverse
        functools.partial(_rotate_planes, perm=perm3),      # k == 3
    ]
    k = jnp.asarray(k, jnp.int32).reshape(())
    out = jax.lax.switch(k, branches, xf)
    return out.reshape(N, C, H, W)


def random_rot90(x, key):
    """Forward pass of RandomRot90: random k in {0,1,2,3}, then rot90."""
    # TODO(synk): torch.randint's host-side RNG is replaced by jax.random here.
    k = jax.random.randint(key, (), 0, 4, dtype=jnp.int32)
    return rot90_pallas(x, k), k


if __name__ == "__main__":
    key = jax.random.PRNGKey(0)
    xkey, rkey = jax.random.split(key)

    # Small NCHW input: batch=2, channels=4, spatial=16x16
    x = jax.random.normal(xkey, (2, 4, 16, 16), dtype=jnp.float32)

    # Check every rotation branch against jnp.rot90 (same semantics as torch.rot90).
    for k_val in range(4):
        out = jax.block_until_ready(rot90_pallas(x, jnp.int32(k_val)))
        ref = jnp.rot90(x, k_val, axes=(2, 3))
        assert out.shape == ref.shape, (k_val, out.shape, ref.shape)
        assert bool(jnp.allclose(out, ref, atol=1e-6, rtol=1e-6)), f"mismatch at k={k_val}"

    # Random forward pass (the actual module behaviour).
    out, k = random_rot90(x, rkey)
    out = jax.block_until_ready(out)
    k_val = int(jax.device_get(k))
    ref = jnp.rot90(x, k_val, axes=(2, 3))
    assert bool(jnp.allclose(out, ref, atol=1e-6, rtol=1e-6)), "mismatch in random path"

    print("KERNEL_OK")
</pallas_src>

<mosaic_0001>
module attributes {stable_mosaic.version = 11 : i64} {
  func.func @_plane_permute_kernel(%arg0: i32, %arg1: memref<8x256xf32, #tpu.memory_space<vmem>>, %arg2: memref<256x256xf32, #tpu.memory_space<vmem>>, %arg3: memref<8x256xf32, #tpu.memory_space<vmem>>) attributes {dimension_semantics = [#tpu.dimension_semantics<parallel>], iteration_bounds = array<i64: 1>, scalar_prefetch = 0 : i64, scratch_operands = 0 : i64, tpu.core_type = #tpu.core_type<tc>, window_params = [{transform_indices = @transform_0, window_bounds = array<i64: 8, 256>}, {pipeline_mode = #tpu.pipeline_mode<synchronous>, transform_indices = @transform_1, window_bounds = array<i64: 256, 256>}, {transform_indices = @transform_2, window_bounds = array<i64: 8, 256>}]} {
    %c0 = arith.constant 0 : index
    %c0_0 = arith.constant 0 : index
    %0 = vector.load %arg1[%c0, %c0_0] : memref<8x256xf32, #tpu.memory_space<vmem>>, vector<8x256xf32>
    %c0_1 = arith.constant 0 : index
    %c0_2 = arith.constant 0 : index
    %1 = vector.load %arg2[%c0_1, %c0_2] : memref<256x256xf32, #tpu.memory_space<vmem>>, vector<256x256xf32>
    %cst = arith.constant dense<0.000000e+00> : vector<8x256xf32>
    %2 = tpu.matmul %0, %1, %cst {dimension_numbers = #tpu.dot_dimension_numbers<[1], [0], [0], [1], [0, 0, 1, 1], [], []>} : vector<8x256xf32>, vector<256x256xf32>, vector<8x256xf32> -> vector<8x256xf32>
    %c0_3 = arith.constant 0 : index
    %c0_4 = arith.constant 0 : index
    %3 = vector.load %arg3[%c0_3, %c0_4] : memref<8x256xf32, #tpu.memory_space<vmem>>, vector<8x256xf32>
    tpu.vector_store %arg3[%c0_3, %c0_4], %2 {strides = array<i32>} : memref<8x256xf32, #tpu.memory_space<vmem>>, vector<8x256xf32>,
    return
  }
  func.func @transform_0(%arg0: i32) -> (i32, i32) {
    %c0_i32 = arith.constant 0 : i32
    %c0_i32_0 = arith.constant 0 : i32
    return %arg0, %c0_i32 : i32, i32
  }
  func.func @transform_1(%arg0: i32) -> (i32, i32) {
    %c0_i32 = arith.constant 0 : i32
    %c0_i32_0 = arith.constant 0 : i32
    %c0_i32_1 = arith.constant 0 : i32
    return %c0_i32, %c0_i32_0 : i32, i32
  }
  func.func @transform_2(%arg0: i32) -> (i32, i32) {
    %c0_i32 = arith.constant 0 : i32
    %c0_i32_0 = arith.constant 0 : i32
    return %arg0, %c0_i32 : i32, i32
  }
}

</mosaic_0001>

<llo_original>
// kernel: branch_1_fun.1
$region0: #{branch_1_fun.1}
  #allocation0 [shape = 'u32[]', space=smem, size = 0x4, offset = 0x4, fixed_abs, tag = 'smem constant byte address 0x4 - core index']
  #allocation1 [shape = 'u32[144,128]{1,0:T(1,128)}', space=vmem, size = 0x12000, scoped, tag = 'internal scratch']
  %s0 = inlined_call_operand.vmem [shape: f32[8,256], index: 0, kind: input, shape index: {}, may-alias: {0,2}]
  %s1 = inlined_call_operand.hbm [shape: f32[256,256], index: 1, kind: input, shape index: {}]
  %s2 = inlined_call_operand.vmem [shape: f32[8,256], index: 2, kind: output, shape index: {}, may-alias: {0,2}]
  %s3 = sld [smem:[#allocation0]]
  $region22: #{branch_1_fun.1} parent=0
    _
  %s5 = ssub.s32 1, %s3
  %s6 = scalar_select 0, %s5, %s3
  $region1: #{branch_1_fun.1} parent=0
    #allocation2 [shape = 'u8[262144]{0}', space=vmem, size = 0x40000, scoped, tag = 'input window, operand 1, single buffered']
    #allocation3 [shape = 's32[1]{0}', space=sflag, size = 0x4, scoped, tag = 'scoped memory for branch_1_fun.1']
    %7 = vsyncpa [#allocation3], 0
    // Predicated region
    $region2: #{branch_1_fun.1} parent=1 // pred_check
      _
    $region3: #{branch_1_fun.1} parent=1 // pred_check_branch
      %9 = sbr.rel (0) target = $region5
    $region4: #{branch_1_fun.1} parent=1 // pred_region
      _
    $region5: #{branch_1_fun.1} parent=1 // pred_fallthru
      _
    // Predicated region
    $region6: #{branch_1_fun.1} parent=1 // pred_check
      _
    $region7: #{branch_1_fun.1} parent=1 // pred_check_branch
      %11 = sbr.rel (0) target = $region9
    $region8: #{branch_1_fun.1} parent=1 // pred_region
      %s13 = ssub.s32 8192, 8192
      %14 = vsyncadd [#allocation3], %s13
      %s15 = sshll.u32 [#allocation2], 4
      %s16 = int_to_ptr.vmem [resolvable:$true] %s15
      %21 = dma.hbm_to_vmem [thread:$0]  %s1, 8192, %s16, [#allocation3], 256, 256, 16
    $region9: #{branch_1_fun.1} parent=1 // pred_fallthru
      _
    // Predicated region
    $region10: #{branch_1_fun.1} parent=1 // pred_check
      _
    $region11: #{branch_1_fun.1} parent=1 // pred_check_branch
      %23 = sbr.rel (0) target = $region13
    $region12: #{branch_1_fun.1} parent=1 // pred_region
      %24 = dma.done [#allocation3], 8192
    $region13: #{branch_1_fun.1} parent=1 // pred_fallthru
      _
    %v25 = vld [vmem:[%s0] sm:$0xff]
    %v26 = vld [vmem:[%s0 + $0x8] sm:$0xff]
    %v27 = vld [vmem:[#allocation2] sm:$0xff]
    %v28 = vld [vmem:[#allocation2 + $0x8] sm:$0xff]
    %v29 = vld [vmem:[#allocation2 + $0x10] sm:$0xff]
    %v30 = vld [vmem:[#allocation2 + $0x18] sm:$0xff]
    %v31 = vld [vmem:[#allocation2 + $0x20] sm:$0xff]
    %v32 = vld [vmem:[#allocation2 + $0x28] sm:$0xff]
    %v33 = vld [vmem:[#allocation2 + $0x30] sm:$0xff]
    %v34 = vld [vmem:[#allocation2 + $0x38] sm:$0xff]
    %v35 = vld [vmem:[#allocation2 + $0x40] sm:$0xff]
    %v36 = vld [vmem:[#allocation2 + $0x48] sm:$0xff]
    %v37 = vld [vmem:[#allocation2 + $0x50] sm:$0xff]
    %v38 = vld [vmem:[#allocation2 + $0x58] sm:$0xff]
    %v39 = vld [vmem:[#allocation2 + $0x60] sm:$0xff]
    %v40 = vld [vmem:[#allocation2 + $0x68] sm:$0xff]
    %v41 = vld [vmem:[#allocation2 + $0x70] sm:$0xff]
    %v42 = vld [vmem:[#allocation2 + $0x78] sm:$0xff]
    %v43 = vld [vmem:[#allocation2 + $0x80] sm:$0xff]
    %v44 = vld [vmem:[#allocation2 + $0x88] sm:$0xff]
    %v45 = vld [vmem:[#allocation2 + $0x90] sm:$0xff]
    %v46 = vld [vmem:[#allocation2 + $0x98] sm:$0xff]
    %v47 = vld [vmem:[#allocation2 + $0xa0] sm:$0xff]
    %v48 = vld [vmem:[#allocation2 + $0xa8] sm:$0xff]
    %v49 = vld [vmem:[#allocation2 + $0xb0] sm:$0xff]
    %v50 = vld [vmem:[#allocation2 + $0xb8] sm:$0xff]
    %v51 = vld [vmem:[#allocation2 + $0xc0] sm:$0xff]
    %v52 = vld [vmem:[#allocation2 + $0xc8] sm:$0xff]
    %v53 = vld [vmem:[#allocation2 + $0xd0] sm:$0xff]
    %v54 = vld [vmem:[#allocation2 + $0xd8] sm:$0xff]
    %v55 = vld [vmem:[#allocation2 + $0xe0] sm:$0xff]
    %v56 = vld [vmem:[#allocation2 + $0xe8] sm:$0xff]
    %v57 = vld [vmem:[#allocation2 + $0xf0] sm:$0xff]
    %v58 = vld [vmem:[#allocation2 + $0xf8] sm:$0xff]
    %v59 = vld [vmem:[#allocation2 + $0x100] sm:$0xff]
    %v60 = vld [vmem:[#allocation2 + $0x108] sm:$0xff]
    %v61 = vld [vmem:[#allocation2 + $0x110] sm:$0xff]
    %v62 = vld [vmem:[#allocation2 + $0x118] sm:$0xff]
    %v63 = vld [vmem:[#allocation2 + $0x120] sm:$0xff]
    %v64 = vld [vmem:[#allocation2 + $0x128] sm:$0xff]
    %v65 = vld [vmem:[#allocation2 + $0x130] sm:$0xff]
    %v66 = vld [vmem:[#allocation2 + $0x138] sm:$0xff]
    %v67 = vld [vmem:[#allocation2 + $0x140] sm:$0xff]
    %v68 = vld [vmem:[#allocation2 + $0x148] sm:$0xff]
    %v69 = vld [vmem:[#allocation2 + $0x150] sm:$0xff]
    %v70 = vld [vmem:[#allocation2 + $0x158] sm:$0xff]
    %v71 = vld [vmem:[#allocation2 + $0x160] sm:$0xff]
    %v72 = vld [vmem:[#allocation2 + $0x168] sm:$0xff]
    %v73 = vld [vmem:[#allocation2 + $0x170] sm:$0xff]
    %v74 = vld [vmem:[#allocation2 + $0x178] sm:$0xff]
    %v75 = vld [vmem:[#allocation2 + $0x180] sm:$0xff]
    %v76 = vld [vmem:[#allocation2 + $0x188] sm:$0xff]
    %v77 = vld [vmem:[#allocation2 + $0x190] sm:$0xff]
    %v78 = vld [vmem:[#allocation2 + $0x198] sm:$0xff]
    %v79 = vld [vmem:[#allocation2 + $0x1a0] sm:$0xff]
    %v80 = vld [vmem:[#allocation2 + $0x1a8] sm:$0xff]
    %v81 = vld [vmem:[#allocation2 + $0x1b0] sm:$0xff]
    %v82 = vld [vmem:[#allocation2 + $0x1b8] sm:$0xff]
    %v83 = vld [vmem:[#allocation2 + $0x1c0] sm:$0xff]
    %v84 = vld [vmem:[#allocation2 + $0x1c8] sm:$0xff]
    %v85 = vld [vmem:[#allocation2 + $0x1d0] sm:$0xff]
    %v86 = vld [vmem:[#allocation2 + $0x1d8] sm:$0xff]
    %v87 = vld [vmem:[#allocation2 + $0x1e0] sm:$0xff]
    %v88 = vld [vmem:[#allocation2 + $0x1e8] sm:$0xff]
    %v89 = vld [vmem:[#allocation2 + $0x1f0] sm:$0xff]
    %v90 = vld [vmem:[#allocation2 + $0x1f8] sm:$0xff]
    %91 = vmatprep.subr.mxu0 %v28
    %92 = vmatpush1.msra.mxu0 %v27
    %93 = vmatprep.subr.mxu0 %v30
    %94 = vmatpush1.msra.mxu0 %v29
    %95 = vmatprep.subr.mxu0 %v32
    %96 = vmatpush1.msra.mxu0 %v31
    %97 = vmatprep.subr.mxu0 %v34
    %98 = vmatpush1.msra.mxu0 %v33
    %99 = vmatprep.subr.mxu0 %v36
    %100 = vmatpush1.msra.mxu0 %v35
    %101 = vmatprep.subr.mxu0 %v38
    %102 = vmatpush1.msra.mxu0 %v37
    %103 = vmatprep.subr.mxu0 %v40
    %104 = vmatpush1.msra.mxu0 %v39
    %105 = vmatprep.subr.mxu0 %v42
    %106 = vmatpush1.msra.mxu0 %v41
    %107 = vmatprep.subr.mxu0 %v44
    %108 = vmatpush1.msra.mxu0 %v43
    %109 = vmatprep.subr.mxu0 %v46
    %110 = vmatpush1.msra.mxu0 %v45
    %111 = vmatprep.subr.mxu0 %v48
    %112 = vmatpush1.msra.mxu0 %v47
    %113 = vmatprep.subr.mxu0 %v50
    %114 = vmatpush1.msra.mxu0 %v49
    %115 = vmatprep.subr.mxu0 %v52
    %116 = vmatpush1.msra.mxu0 %v51
    %117 = vmatprep.subr.mxu0 %v54
    %118 = vmatpush1.msra.mxu0 %v53
    %119 = vmatprep.subr.mxu0 %v56
    %120 = vmatpush1.msra.mxu0 %v55
    %121 = vmatprep.subr.mxu0 %v58
    %122 = vmatpush1.msra.mxu0 %v57
    %123 = vmatprep.subr.mxu0 %v60
    %124 = vmatpush1.msra.mxu0 %v59
    %125 = vmatprep.subr.mxu0 %v62
    %126 = vmatpush1.msra.mxu0 %v61
    %127 = vmatprep.subr.mxu0 %v64
    %128 = vmatpush1.msra.mxu0 %v63
    %129 = vmatprep.subr.mxu0 %v66
    %130 = vmatpush1.msra.mxu0 %v65
    %131 = vmatprep.subr.mxu0 %v68
    %132 = vmatpush1.msra.mxu0 %v67
    %133 = vmatprep.subr.mxu0 %v70
    %134 = vmatpush1.msra.mxu0 %v69
    %135 = vmatprep.subr.mxu0 %v72
    %136 = vmatpush1.msra.mxu0 %v71
    %137 = vmatprep.subr.mxu0 %v74
    %138 = vmatpush1.msra.mxu0 %v73
    %139 = vmatprep.subr.mxu0 %v76
    %140 = vmatpush1.msra.mxu0 %v75
    %141 = vmatprep.subr.mxu0 %v78
    %142 = vmatpush1.msra.mxu0 %v77
    %143 = vmatprep.subr.mxu0 %v80
    %144 = vmatpush1.msra.mxu0 %v79
    %145 = vmatprep.subr.mxu0 %v82
    %146 = vmatpush1.msra.mxu0 %v81
    %147 = vmatprep.subr.mxu0 %v84
    %148 = vmatpush1.msra.mxu0 %v83
    %149 = vmatprep.subr.mxu0 %v86
    %150 = vmatpush1.msra.mxu0 %v85
    %151 = vmatprep.subr.mxu0 %v88
    %152 = vmatpush1.msra.mxu0 %v87
    %153 = vmatprep.subr.mxu0 %v90
    %154 = vmatpush1.msra.mxu0 %v89
    %155 = vmatprep.mubr.f32.mxu0 %v26
    %156 = vmatmul.mubr.f32.gmra.mrb[0].mxu0 %v25
    %v157 = vpop.f32.mrb[0].mxu0
    %v158 = vadd.f32 0.0, %v157
    %v159 = vpop.f32.mrb[0].mxu0
    %v160 = vadd.f32 0.0, %v159
    %161 = vdwg.mxu0
    %162 = vst [vmem:[%s2] sm:$0xff] %v158
    %163 = vst [vmem:[%s2 + $0x8] sm:$0xff] %v160
    // Predicated region
    $region14: #{branch_1_fun.1} parent=1 // pred_check
      _
    $region15: #{branch_1_fun.1} parent=1 // pred_check_branch
      %165 = sbr.rel (0) target = $region17
    $region16: #{branch_1_fun.1} parent=1 // pred_region
      _
    $region17: #{branch_1_fun.1} parent=1 // pred_fallthru
      _
    // Predicated region
    $region18: #{branch_1_fun.1} parent=1 // pred_check
      _
    $region19: #{branch_1_fun.1} parent=1 // pred_check_branch
      %167 = sbr.rel (0) target = $region21
    $region20: #{branch_1_fun.1} parent=1 // pred_region
      _
    $region21: #{branch_1_fun.1} parent=1 // pred_fallthru
      _
    %168 = vsyncpa [#allocation3], 1

</llo_original>
